<compile_context>
chip_gen: v5e
topology: v5e:2x2
jax: 0.10.0
libtpu: 0.0.40
codegen_flags: <defaults>
</compile_context>

<pallas_src>
import functools

import jax
import jax.numpy as jnp
from jax.experimental import pallas as pl
from jax.experimental.pallas import tpu as pltpu


def _round_up(x: int, m: int) -> int:
    return ((x + m - 1) // m) * m


def _cdiv(a: int, b: int) -> int:
    return (a + b - 1) // b


# ----------------------------------------------------------------- kernels

def _ffnn_kernel_noreduce(x_ref, w1_ref, b1_ref, w2_ref, b2_ref, o_ref):
    """Whole hidden dim in one slab: fc1 -> ReLU -> fc2 in a single step."""
    h = jnp.dot(x_ref[...], w1_ref[...], preferred_element_type=jnp.float32)
    h = jnp.maximum(h + b1_ref[...].astype(jnp.float32), 0.0)
    out = jnp.dot(h.astype(w2_ref.dtype), w2_ref[...],
                  preferred_element_type=jnp.float32)
    o_ref[...] = (out + b2_ref[...].astype(jnp.float32)).astype(o_ref.dtype)


def _ffnn_kernel_reduce_f32out(x_ref, w1_ref, b1_ref, w2_ref, b2_ref, o_ref):
    """Hidden dim tiled; the f32 output block doubles as the accumulator."""
    j = pl.program_id(1)

    @pl.when(j == 0)
    def _init():
        o_ref[...] = jnp.zeros_like(o_ref)

    h = jnp.dot(x_ref[...], w1_ref[...], preferred_element_type=jnp.float32)
    h = jnp.maximum(h + b1_ref[...].astype(jnp.float32), 0.0)
    o_ref[...] += jnp.dot(h.astype(w2_ref.dtype), w2_ref[...],
                          preferred_element_type=jnp.float32)

    @pl.when(j == pl.num_programs(1) - 1)
    def _finalize():
        o_ref[...] = o_ref[...] + b2_ref[...].astype(jnp.float32)


def _ffnn_kernel_reduce_acc(x_ref, w1_ref, b1_ref, w2_ref, b2_ref, o_ref,
                            acc_ref):
    """Hidden dim tiled; f32 scratch accumulator (non-f32 output dtypes)."""
    j = pl.program_id(1)

    @pl.when(j == 0)
    def _init():
        acc_ref[...] = jnp.zeros_like(acc_ref)

    h = jnp.dot(x_ref[...], w1_ref[...], preferred_element_type=jnp.float32)
    h = jnp.maximum(h + b1_ref[...].astype(jnp.float32), 0.0)
    acc_ref[...] += jnp.dot(h.astype(w2_ref.dtype), w2_ref[...],
                            preferred_element_type=jnp.float32)

    @pl.when(j == pl.num_programs(1) - 1)
    def _finalize():
        o_ref[...] = (acc_ref[...] + b2_ref[...].astype(jnp.float32)
                      ).astype(o_ref.dtype)


# -------------------------------------------------------- tile selection

_VMEM_BUDGET = 48 << 20      # working-set target: safe under v7x's 64 MiB
_VMEM_LIMIT_CAP = 56 << 20   # never request more scoped VMEM than this


def _largest_divisor_tile(hid_p: int, cap: int) -> int:
    """Largest multiple of 128 that divides hid_p and is <= cap."""
    n = hid_p // 128
    best = 1
    for d in range(1, n + 1):
        if n % d == 0 and 128 * d <= cap:
            best = d
    return 128 * best


def _select_tiles(B, in_p, hid_p, out_p, esz, osz, batch_tile, hidden_tile):
    sub = 8 if esz >= 4 else 16   # sublane alignment for the compute dtype

    def need(tb, th):
        # Double-buffered pipeline inputs/outputs + worst-case f32 scratch.
        return (2 * tb * in_p * esz + 2 * in_p * th * esz + 2 * th * esz
                + 2 * th * out_p * esz + 2 * out_p * esz
                + 2 * tb * out_p * osz + tb * out_p * 4)

    if batch_tile is not None:
        tb = _round_up(batch_tile, sub)
    else:
        # >= 2 batch tiles (v7x megacore) when B permits; <= 512 rows per tile
        # (v5e weight re-streaming); round_up(B / n_tiles) keeps padding small.
        n_i = max(_cdiv(B, 512), 2 if B >= 2 * sub else 1)
        tb = _round_up(_cdiv(B, n_i), sub)

    if hidden_tile is not None:
        th = _round_up(hidden_tile, 128)
    else:
        th = _largest_divisor_tile(hid_p, 512)
        while need(tb, th) > _VMEM_BUDGET and th > 128:
            th = _largest_divisor_tile(hid_p, th - 128)

    if batch_tile is None:
        while need(tb, th) > _VMEM_BUDGET and tb > sub:
            tb = max(sub, _round_up(tb // 2, sub))

    return tb, th, need(tb, th)


# ------------------------------------------------------------- wrappers

def pad_ffnn_params(w1, b1, w2, b2, compute_dtype=None):
    """Pad weights/biases to (8,128)-aligned extents ONCE, outside the hot path.

    Weights are (in, out) = transpose of PyTorch nn.Linear's (out, in) layout.
    Pass compute_dtype=jnp.bfloat16 for ~2-3x MXU throughput and half the
    HBM/VMEM traffic; the kernels always accumulate in f32.
    """
    dt = compute_dtype or w1.dtype
    in_size, hidden = w1.shape
    out_size = w2.shape[1]
    in_p = _round_up(in_size, 128)
    hid_p = _round_up(hidden, 128)
    out_p = _round_up(out_size, 128)
    w1p = jnp.pad(w1.astype(dt), ((0, in_p - in_size), (0, hid_p - hidden)))
    b1p = jnp.pad(jnp.reshape(b1, (1, -1)).astype(dt),
                  ((0, 0), (0, hid_p - hidden)))
    w2p = jnp.pad(w2.astype(dt), ((0, hid_p - hidden), (0, out_p - out_size)))
    b2p = jnp.pad(jnp.reshape(b2, (1, -1)).astype(dt),
                  ((0, 0), (0, out_p - out_size)))
    return w1p, b1p, w2p, b2p


@functools.partial(jax.jit,
                   static_argnames=("out_size", "batch_tile", "hidden_tile"))
def feed_forward_nn(x, w1p, b1p, w2p, b2p, *, out_size=None,
                    batch_tile=None, hidden_tile=None):
    """Fused fc1 -> ReLU -> fc2 forward on pre-padded params.

    x: (B, input_size); params from pad_ffnn_params(); returns (B, out_size)
    in x.dtype (f32 accumulation regardless of compute dtype).
    """
    B, in_size = x.shape
    in_p, hid_p = w1p.shape
    out_p = w2p.shape[1]
    if out_size is None:
        out_size = out_p
    assert in_size <= in_p and w2p.shape[0] == hid_p
    assert in_p % 128 == 0 and hid_p % 128 == 0 and out_p % 128 == 0, \
        "params must be padded with pad_ffnn_params()"

    out_dtype = x.dtype
    compute_dtype = w1p.dtype
    esz = jnp.dtype(compute_dtype).itemsize
    osz = jnp.dtype(out_dtype).itemsize

    tb, th, vmem_need = _select_tiles(B, in_p, hid_p, out_p, esz, osz,
                                      batch_tile, hidden_tile)

    # Rare fallback: user-specified hidden_tile that does not divide hid_p.
    hid_run = _round_up(hid_p, th)
    if hid_run != hid_p:
        w1p = jnp.pad(w1p, ((0, 0), (0, hid_run - hid_p)))
        b1p = jnp.pad(b1p, ((0, 0), (0, hid_run - hid_p)))
        w2p = jnp.pad(w2p, ((0, hid_run - hid_p), (0, 0)))
        hid_p = hid_run

    b_p = _round_up(B, tb)
    xp = jnp.pad(x.astype(compute_dtype),
                 ((0, b_p - B), (0, in_p - in_size)))

    n_i, n_j = b_p // tb, hid_p // th
    compiler_params = pltpu.CompilerParams(
        dimension_semantics=(("parallel",) if n_j == 1
                             else ("parallel", "arbitrary")),
        vmem_limit_bytes=int(min(max(vmem_need * 5 // 4, 32 << 20),
                                 _VMEM_LIMIT_CAP)),
    )
    out_shape = jax.ShapeDtypeStruct((b_p, out_p), out_dtype)

    if n_j == 1:
        # Whole hidden dim in one slab: no reduction axis, no accumulator.
        out_padded = pl.pallas_call(
            _ffnn_kernel_noreduce,
            out_shape=out_shape,
            grid=(n_i,),
            in_specs=[
                pl.BlockSpec((tb, in_p), lambda i: (i, 0)),     # x tile
                pl.BlockSpec((in_p, hid_p), lambda i: (0, 0)),  # w1 (full)
                pl.BlockSpec((1, hid_p), lambda i: (0, 0)),     # b1 (full)
                pl.BlockSpec((hid_p, out_p), lambda i: (0, 0)),  # w2 (full)
                pl.BlockSpec((1, out_p), lambda i: (0, 0)),     # b2 (full)
            ],
            out_specs=pl.BlockSpec((tb, out_p), lambda i: (i, 0)),
            compiler_params=compiler_params,
        )(xp, w1p, b1p, w2p, b2p)
    else:
        use_f32_out_acc = out_dtype == jnp.float32
        kernel = (_ffnn_kernel_reduce_f32out if use_f32_out_acc
                  else _ffnn_kernel_reduce_acc)
        scratch = ([] if use_f32_out_acc
                   else [pltpu.VMEM((tb, out_p), jnp.float32)])
        out_padded = pl.pallas_call(
            kernel,
            out_shape=out_shape,
            grid=(n_i, n_j),
            in_specs=[
                pl.BlockSpec((tb, in_p), lambda i, j: (i, 0)),   # x tile
                pl.BlockSpec((in_p, th), lambda i, j: (0, j)),   # w1 slab
                pl.BlockSpec((1, th), lambda i, j: (0, j)),      # b1 slice
                pl.BlockSpec((th, out_p), lambda i, j: (j, 0)),  # w2 slab
                pl.BlockSpec((1, out_p), lambda i, j: (0, 0)),   # b2 (full)
            ],
            out_specs=pl.BlockSpec((tb, out_p), lambda i, j: (i, 0)),
            scratch_shapes=scratch,
            compiler_params=compiler_params,
        )(xp, w1p, b1p, w2p, b2p)

    return out_padded[:B, :out_size]


def init_params(key, input_size, hidden_size, output_size, dtype=jnp.float32):
    """Deterministic init mimicking nn.Linear's uniform bounds.

    Weights stored as (in, out) = transpose of PyTorch's (out, in) layout.
    """
    k1, k2, k3, k4 = jax.random.split(key, 4)
    bound1 = 1.0 / (input_size ** 0.5)
    bound2 = 1.0 / (hidden_size ** 0.5)
    w1 = jax.random.uniform(k1, (input_size, hidden_size), dtype, -bound1, bound1)
    b1 = jax.random.uniform(k2, (1, hidden_size), dtype, -bound1, bound1)
    w2 = jax.random.uniform(k3, (hidden_size, output_size), dtype, -bound2, bound2)
    b2 = jax.random.uniform(k4, (1, output_size), dtype, -bound2, bound2)
    return w1, b1, w2, b2


def _ref_forward(x, w1, b1, w2, b2):
    """Pure-JAX reference (f32, highest precision)."""
    h = jnp.maximum(
        jnp.dot(x, w1, precision=jax.lax.Precision.HIGHEST) + b1, 0.0)
    return jnp.dot(h, w2, precision=jax.lax.Precision.HIGHEST) + b2


if __name__ == "__main__":
    # --- Test 1: module demo shapes (hidden fits one slab -> no-reduce path).
    input_size, hidden_size, output_size, batch = 16, 32, 8, 8
    kx, kp = jax.random.split(jax.random.PRNGKey(0))
    x = jax.random.normal(kx, (batch, input_size), jnp.float32)
    w1, b1, w2, b2 = init_params(kp, input_size, hidden_size, output_size)
    w1p, b1p, w2p, b2p = pad_ffnn_params(w1, b1, w2, b2)
    out = jax.block_until_ready(
        feed_forward_nn(x, w1p, b1p, w2p, b2p, out_size=output_size))
    ref = _ref_forward(x, w1, b1, w2, b2)
    assert out.shape == (batch, output_size)
    assert jnp.allclose(out, ref, atol=1e-5, rtol=1e-5), \
        float(jnp.max(jnp.abs(out - ref)))

    # --- Test 2: tiled hidden reduction; f32 output accumulates into o_ref.
    input_size, hidden_size, output_size, batch = 16, 256, 8, 24
    kx, kp = jax.random.split(jax.random.PRNGKey(1))
    x = jax.random.normal(kx, (batch, input_size), jnp.float32)
    w1, b1, w2, b2 = init_params(kp, input_size, hidden_size, output_size)
    w1p, b1p, w2p, b2p = pad_ffnn_params(w1, b1, w2, b2)
    out = jax.block_until_ready(
        feed_forward_nn(x, w1p, b1p, w2p, b2p, out_size=output_size,
                        hidden_tile=128))
    ref = _ref_forward(x, w1, b1, w2, b2)
    assert out.shape == (batch, output_size)
    assert jnp.allclose(out, ref, atol=1e-4, rtol=1e-4), \
        float(jnp.max(jnp.abs(out - ref)))

    # --- Test 3: bf16 compute path (scratch-accumulator reduce variant).
    xb = x.astype(jnp.bfloat16)
    w1p, b1p, w2p, b2p = pad_ffnn_params(w1, b1, w2, b2,
                                         compute_dtype=jnp.bfloat16)
    out_bf = jax.block_until_ready(
        feed_forward_nn(xb, w1p, b1p, w2p, b2p, out_size=output_size,
                        hidden_tile=128))
    assert out_bf.shape == (batch, output_size)
    assert out_bf.dtype == jnp.bfloat16
    err = float(jnp.max(jnp.abs(out_bf.astype(jnp.float32) - ref)))
    assert err < 5e-2 * (1.0 + float(jnp.max(jnp.abs(ref)))), err

    # TODO(synk): the DDP training loop / optimizer / DataLoader from the
    # source file are out of scope for a forward-pass kernel.
    print("KERNEL_OK")
</pallas_src>

<mosaic_0001>
module attributes {stable_mosaic.version = 11 : i64} {
  func.func @_ffnn_kernel_noreduce(%arg0: i32, %arg1: memref<8x128xf32, #tpu.memory_space<vmem>>, %arg2: memref<128x128xf32, #tpu.memory_space<vmem>>, %arg3: memref<1x128xf32, #tpu.memory_space<vmem>>, %arg4: memref<128x128xf32, #tpu.memory_space<vmem>>, %arg5: memref<1x128xf32, #tpu.memory_space<vmem>>, %arg6: memref<8x128xf32, #tpu.memory_space<vmem>>) attributes {dimension_semantics = [#tpu.dimension_semantics<parallel>], iteration_bounds = array<i64: 1>, scalar_prefetch = 0 : i64, scratch_operands = 0 : i64, tpu.core_type = #tpu.core_type<tc>, window_params = [{transform_indices = @transform_0, window_bounds = array<i64: 8, 128>}, {pipeline_mode = #tpu.pipeline_mode<synchronous>, transform_indices = @transform_1, window_bounds = array<i64: 128, 128>}, {pipeline_mode = #tpu.pipeline_mode<synchronous>, transform_indices = @transform_2, window_bounds = array<i64: 1, 128>}, {pipeline_mode = #tpu.pipeline_mode<synchronous>, transform_indices = @transform_3, window_bounds = array<i64: 128, 128>}, {pipeline_mode = #tpu.pipeline_mode<synchronous>, transform_indices = @transform_4, window_bounds = array<i64: 1, 128>}, {transform_indices = @transform_5, window_bounds = array<i64: 8, 128>}]} {
    %c0 = arith.constant 0 : index
    %c0_0 = arith.constant 0 : index
    %0 = vector.load %arg1[%c0, %c0_0] : memref<8x128xf32, #tpu.memory_space<vmem>>, vector<8x128xf32>
    %c0_1 = arith.constant 0 : index
    %c0_2 = arith.constant 0 : index
    %1 = vector.load %arg2[%c0_1, %c0_2] : memref<128x128xf32, #tpu.memory_space<vmem>>, vector<128x128xf32>
    %cst = arith.constant dense<0.000000e+00> : vector<8x128xf32>
    %2 = tpu.matmul %0, %1, %cst {dimension_numbers = #tpu.dot_dimension_numbers<[1], [0], [0], [1], [0, 0, 1, 1], [], []>} : vector<8x128xf32>, vector<128x128xf32>, vector<8x128xf32> -> vector<8x128xf32>
    %c0_3 = arith.constant 0 : index
    %c0_4 = arith.constant 0 : index
    %3 = vector.load %arg3[%c0_3, %c0_4] : memref<1x128xf32, #tpu.memory_space<vmem>>, vector<1x128xf32>
    %4 = vector.broadcast %3 : vector<1x128xf32> to vector<8x128xf32>
    %5 = arith.addf %2, %4 : vector<8x128xf32>
    %cst_5 = arith.constant 0.000000e+00 : f32
    %6 = vector.broadcast %cst_5 : f32 to vector<8x128xf32>
    %7 = arith.maximumf %5, %6 : vector<8x128xf32>
    %c0_6 = arith.constant 0 : index
    %c0_7 = arith.constant 0 : index
    %8 = vector.load %arg4[%c0_6, %c0_7] : memref<128x128xf32, #tpu.memory_space<vmem>>, vector<128x128xf32>
    %cst_8 = arith.constant dense<0.000000e+00> : vector<8x128xf32>
    %9 = tpu.matmul %7, %8, %cst_8 {dimension_numbers = #tpu.dot_dimension_numbers<[1], [0], [0], [1], [0, 0, 1, 1], [], []>} : vector<8x128xf32>, vector<128x128xf32>, vector<8x128xf32> -> vector<8x128xf32>
    %c0_9 = arith.constant 0 : index
    %c0_10 = arith.constant 0 : index
    %10 = vector.load %arg5[%c0_9, %c0_10] : memref<1x128xf32, #tpu.memory_space<vmem>>, vector<1x128xf32>
    %11 = vector.broadcast %10 : vector<1x128xf32> to vector<8x128xf32>
    %12 = arith.addf %9, %11 : vector<8x128xf32>
    %c0_11 = arith.constant 0 : index
    %c0_12 = arith.constant 0 : index
    %13 = vector.load %arg6[%c0_11, %c0_12] : memref<8x128xf32, #tpu.memory_space<vmem>>, vector<8x128xf32>
    tpu.vector_store %arg6[%c0_11, %c0_12], %12 {strides = array<i32>} : memref<8x128xf32, #tpu.memory_space<vmem>>, vector<8x128xf32>,
    return
  }
  func.func @transform_0(%arg0: i32) -> (i32, i32) {
    %c0_i32 = arith.constant 0 : i32
    %c0_i32_0 = arith.constant 0 : i32
    return %arg0, %c0_i32 : i32, i32
  }
  func.func @transform_1(%arg0: i32) -> (i32, i32) {
    %c0_i32 = arith.constant 0 : i32
    %c0_i32_0 = arith.constant 0 : i32
    %c0_i32_1 = arith.constant 0 : i32
    return %c0_i32, %c0_i32_0 : i32, i32
  }
  func.func @transform_2(%arg0: i32) -> (i32, i32) {
    %c0_i32 = arith.constant 0 : i32
    %c0_i32_0 = arith.constant 0 : i32
    %c0_i32_1 = arith.constant 0 : i32
    return %c0_i32, %c0_i32_0 : i32, i32
  }
  func.func @transform_3(%arg0: i32) -> (i32, i32) {
    %c0_i32 = arith.constant 0 : i32
    %c0_i32_0 = arith.constant 0 : i32
    %c0_i32_1 = arith.constant 0 : i32
    return %c0_i32, %c0_i32_0 : i32, i32
  }
  func.func @transform_4(%arg0: i32) -> (i32, i32) {
    %c0_i32 = arith.constant 0 : i32
    %c0_i32_0 = arith.constant 0 : i32
    %c0_i32_1 = arith.constant 0 : i32
    return %c0_i32, %c0_i32_0 : i32, i32
  }
  func.func @transform_5(%arg0: i32) -> (i32, i32) {
    %c0_i32 = arith.constant 0 : i32
    %c0_i32_0 = arith.constant 0 : i32
    return %arg0, %c0_i32 : i32, i32
  }
}

</mosaic_0001>

<llo_original>
// kernel: feed_forward_nn.1
$region0: #{feed_forward_nn.1}
  #allocation0 [shape = 'u32[]', space=smem, size = 0x4, offset = 0x4, fixed_abs, tag = 'smem constant byte address 0x4 - core index']
  #allocation1 [shape = 'u32[72,128]{1,0:T(1,128)}', space=vmem, size = 0x9000, scoped, tag = 'internal scratch']
  %s0 = inlined_call_operand.vmem [shape: f32[8,128], index: 0, kind: input, shape index: {}]
  %s1 = inlined_call_operand.hbm [shape: f32[128,128], index: 1, kind: input, shape index: {}]
  %s2 = inlined_call_operand.vmem [shape: f32[1,128], index: 2, kind: input, shape index: {}]
  %s3 = inlined_call_operand.hbm [shape: f32[128,128], index: 3, kind: input, shape index: {}]
  %s4 = inlined_call_operand.vmem [shape: f32[1,128], index: 4, kind: input, shape index: {}]
  %s5 = inlined_call_operand.hbm [shape: f32[8,128], index: 5, kind: output, shape index: {}]
  %s6 = sld [smem:[#allocation0]]
  $region38: #{feed_forward_nn.1} parent=0
    _
  %s8 = ssub.s32 1, %s6
  %s9 = scalar_select 0, %s8, %s6
  $region1: #{feed_forward_nn.1} parent=0
    #allocation2 [shape = 'u8[65536]{0}', space=vmem, size = 0x10000, scoped, tag = 'input window, operand 1, single buffered']
    #allocation3 [shape = 's32[1]{0}', space=sflag, size = 0x4, scoped, tag = 'scoped memory for feed_forward_nn.1']
    #allocation4 [shape = 's32[1]{0}', space=sflag, size = 0x4, scoped, tag = 'scoped memory for feed_forward_nn.1']
    #allocation5 [shape = 'u8[65536]{0}', space=vmem, size = 0x10000, scoped, tag = 'input window, operand 3, single buffered']
    #allocation6 [shape = 's32[1]{0}', space=sflag, size = 0x4, scoped, tag = 'scoped memory for feed_forward_nn.1']
    #allocation7 [shape = 'u8[4096]{0}', space=vmem, size = 0x1000, scoped, tag = 'output window, operand 0, single buffered']
    %10 = vsyncpa [#allocation3], 0
    %11 = vsyncpa [#allocation6], 0
    %12 = vsyncpa [#allocation4], 0
    // Predicated region
    $region2: #{feed_forward_nn.1} parent=1 // pred_check
      _
    $region3: #{feed_forward_nn.1} parent=1 // pred_check_branch
      %14 = sbr.rel (0) target = $region5
    $region4: #{feed_forward_nn.1} parent=1 // pred_region
      _
    $region5: #{feed_forward_nn.1} parent=1 // pred_fallthru
      _
    // Predicated region
    $region6: #{feed_forward_nn.1} parent=1 // pred_check
      _
    $region7: #{feed_forward_nn.1} parent=1 // pred_check_branch
      %16 = sbr.rel (0) target = $region9
    $region8: #{feed_forward_nn.1} parent=1 // pred_region
      %18 = vsyncadd [#allocation3], 0
      %s19 = sshll.u32 %s1, 4
      %s20 = int_to_ptr.hbm [resolvable:$true] %s19
      %s21 = sshll.u32 [#allocation2], 4
      %s22 = int_to_ptr.vmem [resolvable:$true] %s21
      %27 = dma.hbm_to_vmem [thread:$0]  %s20, 2048, %s22, [#allocation3], 128, 128, 8
    $region9: #{feed_forward_nn.1} parent=1 // pred_fallthru
      _
    // Predicated region
    $region10: #{feed_forward_nn.1} parent=1 // pred_check
      _
    $region11: #{feed_forward_nn.1} parent=1 // pred_check_branch
      %29 = sbr.rel (0) target = $region13
    $region12: #{feed_forward_nn.1} parent=1 // pred_region
      _
    $region13: #{feed_forward_nn.1} parent=1 // pred_fallthru
      _
    // Predicated region
    $region14: #{feed_forward_nn.1} parent=1 // pred_check
      _
    $region15: #{feed_forward_nn.1} parent=1 // pred_check_branch
      %31 = sbr.rel (0) target = $region17
    $region16: #{feed_forward_nn.1} parent=1 // pred_region
      %33 = vsyncadd [#allocation6], 0
      %s34 = sshll.u32 %s3, 4
      %s35 = int_to_ptr.hbm [resolvable:$true] %s34
      %s36 = sshll.u32 [#allocation5], 4
      %s37 = int_to_ptr.vmem [resolvable:$true] %s36
      %42 = dma.hbm_to_vmem [thread:$0]  %s35, 2048, %s37, [#allocation6], 128, 128, 8
    $region17: #{feed_forward_nn.1} parent=1 // pred_fallthru
      _
    // Predicated region
    $region18: #{feed_forward_nn.1} parent=1 // pred_check
      _
    $region19: #{feed_forward_nn.1} parent=1 // pred_check_branch
      %44 = sbr.rel (0) target = $region21
    $region20: #{feed_forward_nn.1} parent=1 // pred_region
      _
    $region21: #{feed_forward_nn.1} parent=1 // pred_fallthru
      _
    // Predicated region
    $region22: #{feed_forward_nn.1} parent=1 // pred_check
      _
    $region23: #{feed_forward_nn.1} parent=1 // pred_check_branch
      %46 = sbr.rel (0) target = $region25
    $region24: #{feed_forward_nn.1} parent=1 // pred_region
      %48 = dma.done [#allocation3], 2048
    $region25: #{feed_forward_nn.1} parent=1 // pred_fallthru
      _
    // Predicated region
    $region26: #{feed_forward_nn.1} parent=1 // pred_check
      _
    $region27: #{feed_forward_nn.1} parent=1 // pred_check_branch
      %50 = sbr.rel (0) target = $region29
    $region28: #{feed_forward_nn.1} parent=1 // pred_region
      %52 = dma.done [#allocation6], 2048
    $region29: #{feed_forward_nn.1} parent=1 // pred_fallthru
      _
    %v53 = vld [vmem:[%s0] sm:$0xff]
    %v54 = vld [vmem:[#allocation2] sm:$0xff]
    %v55 = vld [vmem:[#allocation2 + $0x8] sm:$0xff]
    %v56 = vld [vmem:[#allocation2 + $0x10] sm:$0xff]
    %v57 = vld [vmem:[#allocation2 + $0x18] sm:$0xff]
    %v58 = vld [vmem:[#allocation2 + $0x20] sm:$0xff]
    %v59 = vld [vmem:[#allocation2 + $0x28] sm:$0xff]
    %v60 = vld [vmem:[#allocation2 + $0x30] sm:$0xff]
    %v61 = vld [vmem:[#allocation2 + $0x38] sm:$0xff]
    %v62 = vld [vmem:[#allocation2 + $0x40] sm:$0xff]
    %v63 = vld [vmem:[#allocation2 + $0x48] sm:$0xff]
    %v64 = vld [vmem:[#allocation2 + $0x50] sm:$0xff]
    %v65 = vld [vmem:[#allocation2 + $0x58] sm:$0xff]
    %v66 = vld [vmem:[#allocation2 + $0x60] sm:$0xff]
    %v67 = vld [vmem:[#allocation2 + $0x68] sm:$0xff]
    %v68 = vld [vmem:[#allocation2 + $0x70] sm:$0xff]
    %v69 = vld [vmem:[#allocation2 + $0x78] sm:$0xff]
    %v70 = vld [vmem:[%s2] sm:$0x1]
    %v72 = vperm.slane %v70, 0
    %74 = vmatpush.msra.mxu0 %v69
    %75 = vmatpush.msra.mxu0 %v68
    %76 = vmatpush.msra.mxu0 %v67
    %77 = vmatpush.msra.mxu0 %v66
    %78 = vmatpush.msra.mxu0 %v65
    %79 = vmatpush.msra.mxu0 %v64
    %80 = vmatpush.msra.mxu0 %v63
    %81 = vmatpush.msra.mxu0 %v62
    %82 = vmatpush.msra.mxu0 %v61
    %83 = vmatpush.msra.mxu0 %v60
    %84 = vmatpush.msra.mxu0 %v59
    %85 = vmatpush.msra.mxu0 %v58
    %86 = vmatpush.msra.mxu0 %v57
    %87 = vmatpush.msra.mxu0 %v56
    %88 = vmatpush.msra.mxu0 %v55
    %89 = vmatpush.msra.mxu0 %v54
    %90 = vmatmul.f32.gmra.mxu0 %v53
    %v91 = vpop.f32.mrf.mxu0
    %v92 = vadd.f32 %v72, %v91
    %93 = vdwg.mxu0
    %v94 = vmax.f32 %v92, 0.0
    %v95 = vld [vmem:[#allocation5] sm:$0xff]
    %v96 = vld [vmem:[#allocation5 + $0x8] sm:$0xff]
    %v97 = vld [vmem:[#allocation5 + $0x10] sm:$0xff]
    %v98 = vld [vmem:[#allocation5 + $0x18] sm:$0xff]
    %v99 = vld [vmem:[#allocation5 + $0x20] sm:$0xff]
    %v100 = vld [vmem:[#allocation5 + $0x28] sm:$0xff]
    %v101 = vld [vmem:[#allocation5 + $0x30] sm:$0xff]
    %v102 = vld [vmem:[#allocation5 + $0x38] sm:$0xff]
    %v103 = vld [vmem:[#allocation5 + $0x40] sm:$0xff]
    %v104 = vld [vmem:[#allocation5 + $0x48] sm:$0xff]
    %v105 = vld [vmem:[#allocation5 + $0x50] sm:$0xff]
    %v106 = vld [vmem:[#allocation5 + $0x58] sm:$0xff]
    %v107 = vld [vmem:[#allocation5 + $0x60] sm:$0xff]
    %v108 = vld [vmem:[#allocation5 + $0x68] sm:$0xff]
    %v109 = vld [vmem:[#allocation5 + $0x70] sm:$0xff]
    %v110 = vld [vmem:[#allocation5 + $0x78] sm:$0xff]
    %v111 = vld [vmem:[%s4] sm:$0x1]
    %v113 = vperm.slane %v111, 0
    %115 = vmatpush.msra.mxu0 %v110
    %116 = vmatpush.msra.mxu0 %v109
    %117 = vmatpush.msra.mxu0 %v108
    %118 = vmatpush.msra.mxu0 %v107
    %119 = vmatpush.msra.mxu0 %v106
    %120 = vmatpush.msra.mxu0 %v105
    %121 = vmatpush.msra.mxu0 %v104
    %122 = vmatpush.msra.mxu0 %v103
    %123 = vmatpush.msra.mxu0 %v102
    %124 = vmatpush.msra.mxu0 %v101
    %125 = vmatpush.msra.mxu0 %v100
    %126 = vmatpush.msra.mxu0 %v99
    %127 = vmatpush.msra.mxu0 %v98
    %128 = vmatpush.msra.mxu0 %v97
    %129 = vmatpush.msra.mxu0 %v96
    %130 = vmatpush.msra.mxu0 %v95
    %131 = vmatmul.f32.gmra.mxu0 %v94
    %v132 = vpop.f32.mrf.mxu0
    %v133 = vadd.f32 %v113, %v132
    %134 = vdwg.mxu0
    %135 = vst [vmem:[#allocation7] sm:$0xff] %v133
    // Predicated region
    $region30: #{feed_forward_nn.1} parent=1 // pred_check
      _
    $region31: #{feed_forward_nn.1} parent=1 // pred_check_branch
      %137 = sbr.rel (0) target = $region33
    $region32: #{feed_forward_nn.1} parent=1 // pred_region
      %139 = vsyncadd [#allocation4], 0
      %s141 = sshll.u32 [#allocation7], 4
      %s142 = int_to_ptr.vmem [resolvable:$true] %s141
      %s143 = sshll.u32 %s5, 4
      %s144 = int_to_ptr.hbm [resolvable:$true] %s143
      %146 = dma.vmem_to_hbm [thread:$0]  %s142, 128, %s144, [#allocation4]
    $region33: #{feed_forward_nn.1} parent=1 // pred_fallthru
      _
    // Predicated region
    $region34: #{feed_forward_nn.1} parent=1 // pred_check
      _
    $region35: #{feed_forward_nn.1} parent=1 // pred_check_branch
      %148 = sbr.rel (0) target = $region37
    $region36: #{feed_forward_nn.1} parent=1 // pred_region
      %150 = dma.done [#allocation4], 128
    $region37: #{feed_forward_nn.1} parent=1 // pred_fallthru
      _
    %151 = vsyncpa [#allocation3], 1
    %152 = vsyncpa [#allocation6], 1
    %153 = vsyncpa [#allocation4], 1

</llo_original>
